<compile_context>
chip_gen: v5e
topology: v5e:2x2
jax: 0.10.0
libtpu: 0.0.40
codegen_flags: <defaults>
</compile_context>

<pallas_src>
import functools

import jax
import jax.numpy as jnp
from jax.experimental import pallas as pl
from jax.experimental.pallas import tpu as pltpu


def _round_up(n: int, m: int) -> int:
    return ((n + m - 1) // m) * m


# ---------------------------------------------------------------------------
# Kernel
# ---------------------------------------------------------------------------
def mlp_kernel(x_ref, w1_ref, b1_ref, w2_ref, b2_ref, o_ref):
    # Layer 1: Linear (weight-norm scale already folded into w1) + bias + ReLU.
    h = jnp.dot(x_ref[...], w1_ref[...], preferred_element_type=jnp.float32)
    h = jnp.maximum(h + b1_ref[...], 0.0)          # b1 is (1, hid_p) -> broadcast

    # Dropout(p=0.0) == identity (both train and eval) -> no-op.

    # Layer 2: Linear (scale folded into w2) + bias.
    o = jnp.dot(h.astype(w2_ref.dtype), w2_ref[...],
                preferred_element_type=jnp.float32)
    o_ref[...] = (o + b2_ref[...]).astype(o_ref.dtype)


# ---------------------------------------------------------------------------
# pallas_call wrapper
# ---------------------------------------------------------------------------
def simple_mlp_pallas(x, v1t, b1, v2t, b2, *, block_b):
    """x: [B, in_p] (compute dtype); v1t: [in_p, hid_p]; b1: [1, hid_p] f32;
    v2t: [hid_p, out_p]; b2: [1, out_p] f32.  B % block_b == 0, feature dims are
    multiples of 128 (caller guarantees)."""
    B, in_p = x.shape
    hid_p, out_p = v2t.shape
    assert B % block_b == 0
    grid = (B // block_b,)

    # Pinned weights/biases: constant index_map -> single buffer is enough.
    pinned = pl.Buffered(1)

    # VMEM budget: weights x1 (Buffered(1)) + double-buffered x/out tiles + f32 h.
    w_bytes = (in_p * hid_p * v1t.dtype.itemsize
               + hid_p * out_p * v2t.dtype.itemsize
               + (hid_p + out_p) * 4)
    act_bytes = 2 * block_b * (in_p * x.dtype.itemsize + out_p * 4)
    scratch_bytes = block_b * hid_p * 4
    vmem_limit = int(1.5 * (w_bytes + act_bytes + scratch_bytes)) + (2 << 20)
    vmem_limit = max(16 << 20, min(vmem_limit, 100 << 20))

    cost = pl.CostEstimate(
        flops=2 * B * (in_p * hid_p + hid_p * out_p),
        transcendentals=0,
        bytes_accessed=(B * in_p * x.dtype.itemsize + w_bytes + B * out_p * 4),
    )

    return pl.pallas_call(
        mlp_kernel,
        out_shape=jax.ShapeDtypeStruct((B, out_p), jnp.float32),
        grid=grid,
        in_specs=[
            # batch-tiled activations (double-buffered by the pipeline)
            pl.BlockSpec((block_b, in_p), lambda i: (i, 0)),                         # x
            # weights / biases pinned: resident in VMEM, single-buffered
            pl.BlockSpec((in_p, hid_p), lambda i: (0, 0), pipeline_mode=pinned),     # W1^T (scaled)
            pl.BlockSpec((1, hid_p), lambda i: (0, 0), pipeline_mode=pinned),        # b1
            pl.BlockSpec((hid_p, out_p), lambda i: (0, 0), pipeline_mode=pinned),    # W2^T (scaled)
            pl.BlockSpec((1, out_p), lambda i: (0, 0), pipeline_mode=pinned),        # b2
        ],
        out_specs=pl.BlockSpec((block_b, out_p), lambda i: (i, 0)),
        compiler_params=pltpu.CompilerParams(
            # batch axis is independent -> megacore sharding on v7x, harmless elsewhere
            dimension_semantics=("parallel",),
            vmem_limit_bytes=vmem_limit,
        ),
        cost_estimate=cost,
    )(x, v1t, b1, v2t, b2)


# ---------------------------------------------------------------------------
# Parameter handling
# ---------------------------------------------------------------------------
def init_params(key, in_dim, hid_dim, out_dim, dtype=jnp.float32):
    """Raw params in PyTorch layout: Linear weights (out, in); weight_norm(dim=None)
    g is a scalar (perturbed vs ||V||_F to simulate a trained state)."""
    k1, k2, k3, k4 = jax.random.split(key, 4)
    bound1 = 1.0 / jnp.sqrt(in_dim)
    v1 = jax.random.uniform(k1, (hid_dim, in_dim), dtype, -bound1, bound1)
    b1 = jax.random.uniform(k2, (hid_dim,), dtype, -bound1, bound1)
    bound2 = 1.0 / jnp.sqrt(hid_dim)
    v2 = jax.random.uniform(k3, (out_dim, hid_dim), dtype, -bound2, bound2)
    b2 = jax.random.uniform(k4, (out_dim,), dtype, -bound2, bound2)
    g1 = jnp.sqrt(jnp.sum(v1.astype(jnp.float32) ** 2)) * 1.25   # "trained" g != ||V||
    g2 = jnp.sqrt(jnp.sum(v2.astype(jnp.float32) ** 2)) * 0.75
    return (v1, g1, b1), (v2, g2, b2)


def prepare_params(params, *, lane=128, compute_dtype=jnp.float32):
    """One-time offline prep: fold s = g/||V||_F into the weights (in f32, before any
    narrowing cast), transpose to (in, out), zero-pad feature dims to the lane size.
    Use lane=256 on v6e/v7x to fill the 2x256x256 MXU; 128 on v5e."""
    (v1, g1, b1), (v2, g2, b2) = params
    hid_dim, in_dim = v1.shape
    out_dim = v2.shape[0]
    in_p = _round_up(in_dim, lane)
    hid_p = _round_up(hid_dim, lane)
    out_p = _round_up(out_dim, lane)

    w1 = (g1 / jnp.sqrt(jnp.sum(v1.astype(jnp.float32) ** 2))) * v1.astype(jnp.float32)
    w2 = (g2 / jnp.sqrt(jnp.sum(v2.astype(jnp.float32) ** 2))) * v2.astype(jnp.float32)

    v1t = jnp.zeros((in_p, hid_p), compute_dtype).at[:in_dim, :hid_dim].set(
        w1.T.astype(compute_dtype))
    b1p = jnp.zeros((1, hid_p), jnp.float32).at[0, :hid_dim].set(b1.astype(jnp.float32))
    v2t = jnp.zeros((hid_p, out_p), compute_dtype).at[:hid_dim, :out_dim].set(
        w2.T.astype(compute_dtype))
    b2p = jnp.zeros((1, out_p), jnp.float32).at[0, :out_dim].set(b2.astype(jnp.float32))

    # Static Python ints are kept OUT of the jitted pytree (passed as static args).
    return dict(v1t=v1t, b1=b1p, v2t=v2t, b2=b2p, in_dim=in_dim, out_dim=out_dim)


@functools.partial(jax.jit, static_argnames=("out_dim", "block_b"))
def _forward_impl(x, v1t, b1, v2t, b2, *, out_dim, block_b):
    B, in_dim = x.shape
    in_p, hid_p = v1t.shape
    out_p = v2t.shape[1]
    cdt = v1t.dtype

    # Batch tile: multiple of 8 sublanes, capped so the grid has >= 2 steps when
    # possible (lets dimension_semantics=("parallel",) use both v7x TensorCores).
    tb_cap = _round_up(B, 8)
    if B > 8:
        tb_cap = _round_up((B + 1) // 2, 8)
    tb = min(block_b, tb_cap)
    b_p = _round_up(B, tb)

    # Pad only when actually needed (shapes are static here -> Python-level check).
    if (b_p != B) or (in_p != in_dim):
        x_p = jnp.zeros((b_p, in_p), cdt).at[:B, :in_dim].set(x.astype(cdt))
    else:
        x_p = x.astype(cdt)   # no-op when dtypes already match

    out_padded = simple_mlp_pallas(x_p, v1t, b1, v2t, b2, block_b=tb)

    if (b_p == B) and (out_p == out_dim):
        return out_padded
    return out_padded[:B, :out_dim]


def simple_mlp_forward(x, prep, *, block_b=256):
    """Forward pass matching SimpleMLP semantics.  x: [B, in_dim] -> [B, out_dim] f32.
    block_b: 256 default; ~128 on v5e (small VMEM), up to 512 on v6e."""
    return _forward_impl(x, prep["v1t"], prep["b1"], prep["v2t"], prep["b2"],
                         out_dim=prep["out_dim"], block_b=block_b)


def reference_forward(x, params):
    """Pure-JAX reference matching PyTorch semantics (dropout p=0 -> identity)."""
    (v1, g1, b1), (v2, g2, b2) = params
    w1 = g1 * v1 / jnp.sqrt(jnp.sum(v1.astype(jnp.float32) ** 2))
    w2 = g2 * v2 / jnp.sqrt(jnp.sum(v2.astype(jnp.float32) ** 2))
    h = jnp.maximum(x @ w1.T + b1, 0.0)
    return h @ w2.T + b2


if __name__ == "__main__":
    B, in_dim, hid_dim, out_dim = 24, 32, 64, 16
    key = jax.random.PRNGKey(0)
    kx, kp = jax.random.split(key)
    x = jax.random.normal(kx, (B, in_dim), jnp.float32)
    params = init_params(kp, in_dim, hid_dim, out_dim)
    ref = reference_forward(x, params)

    # f32 path: tight verification (also exercises a multi-step parallel batch grid).
    prep_f32 = prepare_params(params, compute_dtype=jnp.float32)
    out_f32 = jax.block_until_ready(simple_mlp_forward(x, prep_f32, block_b=8))
    assert out_f32.shape == (B, out_dim)
    assert jnp.allclose(out_f32, ref, atol=1e-5, rtol=1e-5), "f32 mismatch vs reference"

    # bf16 production path: 2-3x MXU throughput, half the VMEM/HBM footprint.
    prep_bf16 = prepare_params(params, compute_dtype=jnp.bfloat16)
    out_bf16 = jax.block_until_ready(simple_mlp_forward(x, prep_bf16))
    assert out_bf16.shape == (B, out_dim)
    assert jnp.allclose(out_bf16, ref, atol=5e-2, rtol=5e-2), "bf16 mismatch vs reference"

    print("KERNEL_OK")
</pallas_src>

<mosaic_0001>
module attributes {stable_mosaic.version = 11 : i64} {
  func.func @mlp_kernel(%arg0: i32, %arg1: memref<8x128xf32, #tpu.memory_space<vmem>>, %arg2: memref<128x128xf32, #tpu.memory_space<vmem>>, %arg3: memref<1x128xf32, #tpu.memory_space<vmem>>, %arg4: memref<128x128xf32, #tpu.memory_space<vmem>>, %arg5: memref<1x128xf32, #tpu.memory_space<vmem>>, %arg6: memref<8x128xf32, #tpu.memory_space<vmem>>) attributes {dimension_semantics = [#tpu.dimension_semantics<parallel>], iteration_bounds = array<i64: 3>, scalar_prefetch = 0 : i64, scratch_operands = 0 : i64, tpu.core_type = #tpu.core_type<tc>, window_params = [{transform_indices = @transform_0, window_bounds = array<i64: 8, 128>}, {pipeline_mode = #tpu.pipeline_mode<synchronous>, transform_indices = @transform_1, window_bounds = array<i64: 128, 128>}, {pipeline_mode = #tpu.pipeline_mode<synchronous>, transform_indices = @transform_2, window_bounds = array<i64: 1, 128>}, {pipeline_mode = #tpu.pipeline_mode<synchronous>, transform_indices = @transform_3, window_bounds = array<i64: 128, 128>}, {pipeline_mode = #tpu.pipeline_mode<synchronous>, transform_indices = @transform_4, window_bounds = array<i64: 1, 128>}, {transform_indices = @transform_5, window_bounds = array<i64: 8, 128>}]} {
    %c0 = arith.constant 0 : index
    %c0_0 = arith.constant 0 : index
    %0 = vector.load %arg1[%c0, %c0_0] : memref<8x128xf32, #tpu.memory_space<vmem>>, vector<8x128xf32>
    %c0_1 = arith.constant 0 : index
    %c0_2 = arith.constant 0 : index
    %1 = vector.load %arg2[%c0_1, %c0_2] : memref<128x128xf32, #tpu.memory_space<vmem>>, vector<128x128xf32>
    %cst = arith.constant dense<0.000000e+00> : vector<8x128xf32>
    %2 = tpu.matmul %0, %1, %cst {dimension_numbers = #tpu.dot_dimension_numbers<[1], [0], [0], [1], [0, 0, 1, 1], [], []>} : vector<8x128xf32>, vector<128x128xf32>, vector<8x128xf32> -> vector<8x128xf32>
    %c0_3 = arith.constant 0 : index
    %c0_4 = arith.constant 0 : index
    %3 = vector.load %arg3[%c0_3, %c0_4] : memref<1x128xf32, #tpu.memory_space<vmem>>, vector<1x128xf32>
    %4 = vector.broadcast %3 : vector<1x128xf32> to vector<8x128xf32>
    %5 = arith.addf %2, %4 : vector<8x128xf32>
    %cst_5 = arith.constant 0.000000e+00 : f32
    %6 = vector.broadcast %cst_5 : f32 to vector<8x128xf32>
    %7 = arith.maximumf %5, %6 : vector<8x128xf32>
    %c0_6 = arith.constant 0 : index
    %c0_7 = arith.constant 0 : index
    %8 = vector.load %arg4[%c0_6, %c0_7] : memref<128x128xf32, #tpu.memory_space<vmem>>, vector<128x128xf32>
    %cst_8 = arith.constant dense<0.000000e+00> : vector<8x128xf32>
    %9 = tpu.matmul %7, %8, %cst_8 {dimension_numbers = #tpu.dot_dimension_numbers<[1], [0], [0], [1], [0, 0, 1, 1], [], []>} : vector<8x128xf32>, vector<128x128xf32>, vector<8x128xf32> -> vector<8x128xf32>
    %c0_9 = arith.constant 0 : index
    %c0_10 = arith.constant 0 : index
    %10 = vector.load %arg5[%c0_9, %c0_10] : memref<1x128xf32, #tpu.memory_space<vmem>>, vector<1x128xf32>
    %11 = vector.broadcast %10 : vector<1x128xf32> to vector<8x128xf32>
    %12 = arith.addf %9, %11 : vector<8x128xf32>
    %c0_11 = arith.constant 0 : index
    %c0_12 = arith.constant 0 : index
    %13 = vector.load %arg6[%c0_11, %c0_12] : memref<8x128xf32, #tpu.memory_space<vmem>>, vector<8x128xf32>
    tpu.vector_store %arg6[%c0_11, %c0_12], %12 {strides = array<i32>} : memref<8x128xf32, #tpu.memory_space<vmem>>, vector<8x128xf32>,
    return
  }
  func.func @transform_0(%arg0: i32) -> (i32, i32) {
    %c0_i32 = arith.constant 0 : i32
    %c0_i32_0 = arith.constant 0 : i32
    return %arg0, %c0_i32 : i32, i32
  }
  func.func @transform_1(%arg0: i32) -> (i32, i32) {
    %c0_i32 = arith.constant 0 : i32
    %c0_i32_0 = arith.constant 0 : i32
    %c0_i32_1 = arith.constant 0 : i32
    return %c0_i32, %c0_i32_0 : i32, i32
  }
  func.func @transform_2(%arg0: i32) -> (i32, i32) {
    %c0_i32 = arith.constant 0 : i32
    %c0_i32_0 = arith.constant 0 : i32
    %c0_i32_1 = arith.constant 0 : i32
    return %c0_i32, %c0_i32_0 : i32, i32
  }
  func.func @transform_3(%arg0: i32) -> (i32, i32) {
    %c0_i32 = arith.constant 0 : i32
    %c0_i32_0 = arith.constant 0 : i32
    %c0_i32_1 = arith.constant 0 : i32
    return %c0_i32, %c0_i32_0 : i32, i32
  }
  func.func @transform_4(%arg0: i32) -> (i32, i32) {
    %c0_i32 = arith.constant 0 : i32
    %c0_i32_0 = arith.constant 0 : i32
    %c0_i32_1 = arith.constant 0 : i32
    return %c0_i32, %c0_i32_0 : i32, i32
  }
  func.func @transform_5(%arg0: i32) -> (i32, i32) {
    %c0_i32 = arith.constant 0 : i32
    %c0_i32_0 = arith.constant 0 : i32
    return %arg0, %c0_i32 : i32, i32
  }
}

</mosaic_0001>

<llo_original>
// kernel: _forward_impl.1
$region0: #{_forward_impl.1}
  #allocation0 [shape = 'u32[]', space=smem, size = 0x4, offset = 0x4, fixed_abs, tag = 'smem constant byte address 0x4 - core index']
  #allocation1 [shape = 'u32[72,128]{1,0:T(1,128)}', space=vmem, size = 0x9000, scoped, tag = 'internal scratch']
  %s0 = inlined_call_operand.vmem [shape: f32[24,128], index: 0, kind: input, shape index: {}]
  %s1 = inlined_call_operand.hbm [shape: f32[128,128], index: 1, kind: input, shape index: {}]
  %s2 = inlined_call_operand.vmem [shape: f32[1,128], index: 2, kind: input, shape index: {}]
  %s3 = inlined_call_operand.hbm [shape: f32[128,128], index: 3, kind: input, shape index: {}]
  %s4 = inlined_call_operand.vmem [shape: f32[1,128], index: 4, kind: input, shape index: {}]
  %s5 = inlined_call_operand.vmem [shape: f32[24,128], index: 5, kind: output, shape index: {}]
  %s6 = sld [smem:[#allocation0]]
  $region61: #{_forward_impl.1} parent=0
    _
  %s8 = ssub.s32 1, %s6
  %s9 = scalar_select 0, %s8, %s6
  $region1: #{_forward_impl.1} parent=0
    #allocation2 [shape = 'u8[65536]{0}', space=vmem, size = 0x10000, scoped, tag = 'input window, operand 1, single buffered']
    #allocation3 [shape = 's32[2]{0}', space=sflag, size = 0x8, scoped, tag = 'scoped memory for _forward_impl.1']
    #allocation4 [shape = 'u8[65536]{0}', space=vmem, size = 0x10000, scoped, tag = 'input window, operand 3, single buffered']
    #allocation5 [shape = 's32[1]{0}', space=sflag, size = 0x4, scoped, tag = 'scoped memory for _forward_impl.1']
    %10 = vsyncpa [#allocation3], 0
    %11 = vsyncpa [#allocation5], 0
    loop: start=0, step=1, limit=5
    $region2: #{_forward_impl.1} parent=1 // loop_pre_header
      _
    $region3: #{_forward_impl.1} parent=1 // loop_header
      %s13 = sphi 0, %s17
      %p14 = scmp.ge.s32.totalorder %s13, 5
      %s23 = sphi 0, %s25
      %s26 = sphi 0, %s23
      %s27 = sphi 0, %s26
      %s43 = sphi 0, %s27
      %s47 = sphi 0, %s47
      %s49 = sphi 0, %s47
      %s50 = sphi 0, %s49
      %s64 = sphi 0, %s50
      %s68 = sphi 0, %s68
      %s70 = sphi 0, %s68
      %s71 = sphi 0, %s70
      %s85 = sphi 0, %s71
      %s89 = sphi 0, %s89
      %s91 = sphi 0, %s89
      %s92 = sphi 0, %s91
      %s106 = sphi 0, %s92
      %s110 = sphi 0, %s110
      %s112 = sphi 0, %s110
      %s113 = sphi 0, %s112
      %s127 = sphi 0, %s113
      %s133 = sphi 0, %s135
      %s136 = sphi 0, %s133
      %s137 = sphi 0, %s136
      %s153 = sphi 0, %s137
    $region4: #{_forward_impl.1} parent=1 // loop_header_branch
      %16 = sbr.rel (%p14) target = $region8
    $region5: #{_forward_impl.1} parent=1 // loop_body
      %s18 = ssub.s32 %s13, 1
      %s19 = ssub.s32 %s13, 2
      %s20 = sadd.s32 %s13, 1
      %s21 = ssub.s32 %s13, %s20
      %p22 = scmp.eq.s32.totalorder %s21, 0
      %s24 = sadd.s32 %s23, 1
      %s25 = scalar_select %p22, %s23, %s24
      %p28 = pneg %p22
      %p29 = scmp.eq.s32.totalorder %s13, 2
      %p30 = por %p28, %p29
      %p31 = scmp.ne.s32.totalorder %s23, %s26
      %p32 = scmp.eq.s32.totalorder %s13, 0
      %p33 = por %p31, %p32
      %p34 = scmp.ne.s32.totalorder %s23, %s26
      %p35 = scmp.eq.s32.totalorder %s18, 2
      %p36 = por %p34, %p35
      %p37 = scmp.ne.s32.totalorder %s26, %s27
      %p38 = scmp.eq.s32.totalorder %s18, 0
      %p39 = por %p37, %p38
      %p40 = scmp.ne.s32.totalorder %s26, %s27
      %p41 = scmp.eq.s32.totalorder %s19, 2
      %p42 = por %p40, %p41
      %p44 = scmp.ne.s32.totalorder %s27, %s43
      %p45 = scmp.eq.s32.totalorder %s19, 0
      %p46 = por %p44, %p45
      %s48 = sadd.s32 %s47, 1
      %p51 = scmp.eq.s32.totalorder %s13, 2
      %p52 = scmp.ne.s32.totalorder %s47, %s49
      %p53 = scmp.eq.s32.totalorder %s13, 0
      %p54 = por %p52, %p53
      %p55 = scmp.ne.s32.totalorder %s47, %s49
      %p56 = scmp.eq.s32.totalorder %s18, 2
      %p57 = por %p55, %p56
      %p58 = scmp.ne.s32.totalorder %s49, %s50
      %p59 = scmp.eq.s32.totalorder %s18, 0
      %p60 = por %p58, %p59
      %p61 = scmp.ne.s32.totalorder %s49, %s50
      %p62 = scmp.eq.s32.totalorder %s19, 2
      %p63 = por %p61, %p62
      %p65 = scmp.ne.s32.totalorder %s50, %s64
      %p66 = scmp.eq.s32.totalorder %s19, 0
      %p67 = por %p65, %p66
      %s69 = sadd.s32 %s68, 1
      %p72 = scmp.eq.s32.totalorder %s13, 2
      %p73 = scmp.ne.s32.totalorder %s68, %s70
      %p74 = scmp.eq.s32.totalorder %s13, 0
      %p75 = por %p73, %p74
      %p76 = scmp.ne.s32.totalorder %s68, %s70
      %p77 = scmp.eq.s32.totalorder %s18, 2
      %p78 = por %p76, %p77
      %p79 = scmp.ne.s32.totalorder %s70, %s71
      %p80 = scmp.eq.s32.totalorder %s18, 0
      %p81 = por %p79, %p80
      %p82 = scmp.ne.s32.totalorder %s70, %s71
      %p83 = scmp.eq.s32.totalorder %s19, 2
      %p84 = por %p82, %p83
      %p86 = scmp.ne.s32.totalorder %s71, %s85
      %p87 = scmp.eq.s32.totalorder %s19, 0
      %p88 = por %p86, %p87
      %s90 = sadd.s32 %s89, 1
      %p93 = scmp.eq.s32.totalorder %s13, 2
      %p94 = scmp.ne.s32.totalorder %s89, %s91
      %p95 = scmp.eq.s32.totalorder %s13, 0
      %p96 = por %p94, %p95
      %p97 = scmp.ne.s32.totalorder %s89, %s91
      %p98 = scmp.eq.s32.totalorder %s18, 2
      %p99 = por %p97, %p98
      %p100 = scmp.ne.s32.totalorder %s91, %s92
      %p101 = scmp.eq.s32.totalorder %s18, 0
      %p102 = por %p100, %p101
      %p103 = scmp.ne.s32.totalorder %s91, %s92
      %p104 = scmp.eq.s32.totalorder %s19, 2
      %p105 = por %p103, %p104
      %p107 = scmp.ne.s32.totalorder %s92, %s106
      %p108 = scmp.eq.s32.totalorder %s19, 0
      %p109 = por %p107, %p108
      %s111 = sadd.s32 %s110, 1
      %p114 = scmp.eq.s32.totalorder %s13, 2
      %p115 = scmp.ne.s32.totalorder %s110, %s112
      %p116 = scmp.eq.s32.totalorder %s13, 0
      %p117 = por %p115, %p116
      %p118 = scmp.ne.s32.totalorder %s110, %s112
      %p119 = scmp.eq.s32.totalorder %s18, 2
      %p120 = por %p118, %p119
      %p121 = scmp.ne.s32.totalorder %s112, %s113
      %p122 = scmp.eq.s32.totalorder %s18, 0
      %p123 = por %p121, %p122
      %p124 = scmp.ne.s32.totalorder %s112, %s113
      %p125 = scmp.eq.s32.totalorder %s19, 2
      %p126 = por %p124, %p125
      %p128 = scmp.ne.s32.totalorder %s113, %s127
      %p129 = scmp.eq.s32.totalorder %s19, 0
      %p130 = por %p128, %p129
      %s131 = ssub.s32 %s13, %s20
      %p132 = scmp.eq.s32.totalorder %s131, 0
      %s134 = sadd.s32 %s133, 1
      %s135 = scalar_select %p132, %s133, %s134
      %p138 = pneg %p132
      %p139 = scmp.eq.s32.totalorder %s13, 2
      %p140 = por %p138, %p139
      %p141 = scmp.ne.s32.totalorder %s133, %s136
      %p142 = scmp.eq.s32.totalorder %s13, 0
      %p143 = por %p141, %p142
      %p144 = scmp.ne.s32.totalorder %s133, %s136
      %p145 = scmp.eq.s32.totalorder %s18, 2
      %p146 = por %p144, %p145
      %p147 = scmp.ne.s32.totalorder %s136, %s137
      %p148 = scmp.eq.s32.totalorder %s18, 0
      %p149 = por %p147, %p148
      %p150 = scmp.ne.s32.totalorder %s136, %s137
      %p151 = scmp.eq.s32.totalorder %s19, 2
      %p152 = por %p150, %p151
      %p154 = scmp.ne.s32.totalorder %s137, %s153
      %p155 = scmp.eq.s32.totalorder %s19, 0
      %p156 = por %p154, %p155
      %p157 = scmp.le.s32.totalorder 1, %s13
      %p158 = scmp.lt.s32.totalorder %s13, 4
      %p159 = pnand %p157, %p158
      %p160 = pneg %p159
      // Predicated region
      $region9: #{_forward_impl.1} parent=5 // pred_check
        _
      $region10: #{_forward_impl.1} parent=5 // pred_check_branch
        %162 = sbr.rel (%p159) target = $region12
      $region11: #{_forward_impl.1} parent=5 // pred_region
        %s163 = ssub.s32 %s13, 1
        // Predicated region
        $region13: #{_forward_impl.1} parent=11 // pred_check
          %p164 = pneg %p60
        $region14: #{_forward_impl.1} parent=11 // pred_check_branch
          %166 = sbr.rel (%p164) target = $region16
        $region15: #{_forward_impl.1} parent=11 // pred_region
          %168 = vsyncadd [#allocation3], 0
          %s169 = sshll.u32 %s1, 4
          %s170 = int_to_ptr.hbm [resolvable:$true] %s169
          %s171 = sshll.u32 [#allocation2], 4
          %s172 = int_to_ptr.vmem [resolvable:$true] %s171
          %177 = dma.hbm_to_vmem [thread:$0]  %s170, 2048, %s172, [#allocation3], 128, 128, 8
        $region16: #{_forward_impl.1} parent=11 // pred_fallthru
          _
        // Predicated region
        $region17: #{_forward_impl.1} parent=11 // pred_check
          %p178 = pneg %p81
        $region18: #{_forward_impl.1} parent=11 // pred_check_branch
          %180 = sbr.rel (%p178) target = $region20
        $region19: #{_forward_impl.1} parent=11 // pred_region
          _
        $region20: #{_forward_impl.1} parent=11 // pred_fallthru
          _
        // Predicated region
        $region21: #{_forward_impl.1} parent=11 // pred_check
          %p181 = pneg %p102
        $region22: #{_forward_impl.1} parent=11 // pred_check_branch
          %183 = sbr.rel (%p181) target = $region24
        $region23: #{_forward_impl.1} parent=11 // pred_region
          %185 = vsyncadd [#allocation5], 0
          %s186 = sshll.u32 %s3, 4
          %s187 = int_to_ptr.hbm [resolvable:$true] %s186
          %s188 = sshll.u32 [#allocation4], 4
          %s189 = int_to_ptr.vmem [resolvable:$true] %s188
          %194 = dma.hbm_to_vmem [thread:$0]  %s187, 2048, %s189, [#allocation5], 128, 128, 8
        $region24: #{_forward_impl.1} parent=11 // pred_fallthru
          _
        // Predicated region
        $region25: #{_forward_impl.1} parent=11 // pred_check
          %p195 = pneg %p123
        $region26: #{_forward_impl.1} parent=11 // pred_check_branch
          %197 = sbr.rel (%p195) target = $region28
        $region27: #{_forward_impl.1} parent=11 // pred_region
          _
        $region28: #{_forward_impl.1} parent=11 // pred_fallthru
          _
      $region12: #{_forward_impl.1} parent=5 // pred_fallthru
        _
      %p198 = scmp.lt.s32.totalorder %s13, 3
      // Predicated region
      $region29: #{_forward_impl.1} parent=5 // pred_check
        %p199 = pneg %p198
      $region30: #{_forward_impl.1} parent=5 // pred_check_branch
        %201 = sbr.rel (%p199) target = $region32
      $region31: #{_forward_impl.1} parent=5 // pred_region
        // Predicated region
        $region33: #{_forward_impl.1} parent=31 // pred_check
          %p202 = pneg %p33
        $region34: #{_forward_impl.1} parent=31 // pred_check_branch
          %204 = sbr.rel (%p202) target = $region36
        $region35: #{_forward_impl.1} parent=31 // pred_region
          %p205 = scmp.lt.s32.totalorder %s13, 2
          %s206 = scalar_select %p205, %s13, 2
          %s207 = smul.addr %s206, 8
          %s208 = scalar_lea.vmem %s0, %s207
        $region36: #{_forward_impl.1} parent=31 // pred_fallthru
          _
      $region32: #{_forward_impl.1} parent=5 // pred_fallthru
        _
      %p209 = scmp.le.s32.totalorder 1, %s13
      %p210 = scmp.lt.s32.totalorder %s13, 4
      %p211 = pnand %p209, %p210
      %p212 = pneg %p211
      // Predicated region
      $region37: #{_forward_impl.1} parent=5 // pred_check
        _
      $region38: #{_forward_impl.1} parent=5 // pred_check_branch
        %214 = sbr.rel (%p211) target = $region40
      $region39: #{_forward_impl.1} parent=5 // pred_region
        %s215 = ssub.s32 %s13, 1
        // Predicated region
        $region41: #{_forward_impl.1} parent=39 // pred_check
          %p216 = pneg %p60
        $region42: #{_forward_impl.1} parent=39 // pred_check_branch
          %218 = sbr.rel (%p216) target = $region44
        $region43: #{_forward_impl.1} parent=39 // pred_region
          %220 = dma.done [#allocation3], 2048
        $region44: #{_forward_impl.1} parent=39 // pred_fallthru
          _
        // Predicated region
        $region45: #{_forward_impl.1} parent=39 // pred_check
          %p221 = pneg %p102
        $region46: #{_forward_impl.1} parent=39 // pred_check_branch
          %223 = sbr.rel (%p221) target = $region48
        $region47: #{_forward_impl.1} parent=39 // pred_region
          %225 = dma.done [#allocation5], 2048
        $region48: #{_forward_impl.1} parent=39 // pred_fallthru
          _
        %p226 = scmp.lt.s32.totalorder %s18, 2
        %s227 = scalar_select %p226, %s18, 2
        %s228 = smul.addr %s227, 8
        %s229 = scalar_lea.vmem %s0, %s228
        %p230 = pneg %p39
        %p231 = pneg %p36
        %p232 = pneg %p60
        %p233 = pneg %p57
        %p234 = pneg %p81
        %p235 = pneg %p78
        %p236 = pneg %p102
        %p237 = pneg %p99
        %p238 = pneg %p123
        %p239 = pneg %p120
        %p240 = pneg %p149
        %p241 = pneg %p146
        %p242 = scmp.lt.s32.totalorder %s18, 2
        %s243 = scalar_select %p242, %s18, 2
        %s244 = smul.addr %s243, 8
        %s245 = scalar_lea.vmem %s5, %s244
        %p246 = scmp.lt.s32.totalorder %s18, 2
        %s247 = scalar_select %p246, %s18, 2
        %s248 = smul.addr %s247, 8
        %s249 = scalar_lea.vmem %s0, %s248
        %p250 = scmp.lt.s32.totalorder %s18, 2
        %s251 = scalar_select %p250, %s18, 2
        %s252 = smul.addr %s251, 8
        %s253 = scalar_lea.vmem %s5, %s252
        %v254 = vld [vmem:[%s249] sm:$0xff]
        %v255 = vld [vmem:[#allocation2] sm:$0xff]
        %v256 = vld [vmem:[#allocation2 + $0x8] sm:$0xff]
        %v257 = vld [vmem:[#allocation2 + $0x10] sm:$0xff]
        %v258 = vld [vmem:[#allocation2 + $0x18] sm:$0xff]
        %v259 = vld [vmem:[#allocation2 + $0x20] sm:$0xff]
        %v260 = vld [vmem:[#allocation2 + $0x28] sm:$0xff]
        %v261 = vld [vmem:[#allocation2 + $0x30] sm:$0xff]
        %v262 = vld [vmem:[#allocation2 + $0x38] sm:$0xff]
        %v263 = vld [vmem:[#allocation2 + $0x40] sm:$0xff]
        %v264 = vld [vmem:[#allocation2 + $0x48] sm:$0xff]
        %v265 = vld [vmem:[#allocation2 + $0x50] sm:$0xff]
        %v266 = vld [vmem:[#allocation2 + $0x58] sm:$0xff]
        %v267 = vld [vmem:[#allocation2 + $0x60] sm:$0xff]
        %v268 = vld [vmem:[#allocation2 + $0x68] sm:$0xff]
        %v269 = vld [vmem:[#allocation2 + $0x70] sm:$0xff]
        %v270 = vld [vmem:[#allocation2 + $0x78] sm:$0xff]
        %v271 = vld [vmem:[%s2] sm:$0x1]
        %v273 = vperm.slane %v271, 0
        %275 = vmatpush.msra.mxu0 %v270
        %276 = vmatpush.msra.mxu0 %v269
        %277 = vmatpush.msra.mxu0 %v268
        %278 = vmatpush.msra.mxu0 %v267
        %279 = vmatpush.msra.mxu0 %v266
        %280 = vmatpush.msra.mxu0 %v265
        %281 = vmatpush.msra.mxu0 %v264
        %282 = vmatpush.msra.mxu0 %v263
        %283 = vmatpush.msra.mxu0 %v262
        %284 = vmatpush.msra.mxu0 %v261
        %285 = vmatpush.msra.mxu0 %v260
        %286 = vmatpush.msra.mxu0 %v259
        %287 = vmatpush.msra.mxu0 %v258
        %288 = vmatpush.msra.mxu0 %v257
        %289 = vmatpush.msra.mxu0 %v256
        %290 = vmatpush.msra.mxu0 %v255
        %291 = vmatmul.f32.gmra.mxu0 %v254
        %v292 = vpop.f32.mrf.mxu0
        %v293 = vadd.f32 %v273, %v292
        %294 = vdwg.mxu0
        %v295 = vmax.f32 %v293, 0.0
        %v296 = vld [vmem:[#allocation4] sm:$0xff]
        %v297 = vld [vmem:[#allocation4 + $0x8] sm:$0xff]
        %v298 = vld [vmem:[#allocation4 + $0x10] sm:$0xff]
        %v299 = vld [vmem:[#allocation4 + $0x18] sm:$0xff]
        %v300 = vld [vmem:[#allocation4 + $0x20] sm:$0xff]
        %v301 = vld [vmem:[#allocation4 + $0x28] sm:$0xff]
        %v302 = vld [vmem:[#allocation4 + $0x30] sm:$0xff]
        %v303 = vld [vmem:[#allocation4 + $0x38] sm:$0xff]
        %v304 = vld [vmem:[#allocation4 + $0x40] sm:$0xff]
        %v305 = vld [vmem:[#allocation4 + $0x48] sm:$0xff]
        %v306 = vld [vmem:[#allocation4 + $0x50] sm:$0xff]
        %v307 = vld [vmem:[#allocation4 + $0x58] sm:$0xff]
        %v308 = vld [vmem:[#allocation4 + $0x60] sm:$0xff]
        %v309 = vld [vmem:[#allocation4 + $0x68] sm:$0xff]
        %v310 = vld [vmem:[#allocation4 + $0x70] sm:$0xff]
        %v311 = vld [vmem:[#allocation4 + $0x78] sm:$0xff]
        %v312 = vld [vmem:[%s4] sm:$0x1]
        %v314 = vperm.slane %v312, 0
        %316 = vmatpush.msra.mxu0 %v311
        %317 = vmatpush.msra.mxu0 %v310
        %318 = vmatpush.msra.mxu0 %v309
        %319 = vmatpush.msra.mxu0 %v308
        %320 = vmatpush.msra.mxu0 %v307
        %321 = vmatpush.msra.mxu0 %v306
        %322 = vmatpush.msra.mxu0 %v305
        %323 = vmatpush.msra.mxu0 %v304
        %324 = vmatpush.msra.mxu0 %v303
        %325 = vmatpush.msra.mxu0 %v302
        %326 = vmatpush.msra.mxu0 %v301
        %327 = vmatpush.msra.mxu0 %v300
        %328 = vmatpush.msra.mxu0 %v299
        %329 = vmatpush.msra.mxu0 %v298
        %330 = vmatpush.msra.mxu0 %v297
        %331 = vmatpush.msra.mxu0 %v296
        %332 = vmatmul.f32.gmra.mxu0 %v295
        %v333 = vpop.f32.mrf.mxu0
        %v334 = vadd.f32 %v314, %v333
        %335 = vdwg.mxu0
        %336 = vst [vmem:[%s253] sm:$0xff] %v334
        %p337 = scmp.lt.s32.totalorder %s18, 2
        %s338 = scalar_select %p337, %s18, 2
        %s339 = smul.addr %s338, 8
        %s340 = scalar_lea.vmem %s5, %s339
        // Predicated region
        $region49: #{_forward_impl.1} parent=39 // pred_check
          %p341 = pneg %p146
        $region50: #{_forward_impl.1} parent=39 // pred_check_branch
          %343 = sbr.rel (%p341) target = $region52
        $region51: #{_forward_impl.1} parent=39 // pred_region
          _
        $region52: #{_forward_impl.1} parent=39 // pred_fallthru
          _
      $region40: #{_forward_impl.1} parent=5 // pred_fallthru
        _
      %p344 = scmp.le.s32.totalorder 2, %s13
      // Predicated region
      $region53: #{_forward_impl.1} parent=5 // pred_check
        %p345 = pneg %p344
      $region54: #{_forward_impl.1} parent=5 // pred_check_branch
        %347 = sbr.rel (%p345) target = $region56
      $region55: #{_forward_impl.1} parent=5 // pred_region
        %s348 = ssub.s32 %s13, 2
        // Predicated region
        $region57: #{_forward_impl.1} parent=55 // pred_check
          %p349 = pneg %p152
        $region58: #{_forward_impl.1} parent=55 // pred_check_branch
          %351 = sbr.rel (%p349) target = $region60
        $region59: #{_forward_impl.1} parent=55 // pred_region
          %p352 = scmp.lt.s32.totalorder %s19, 2
          %s353 = scalar_select %p352, %s19, 2
          %s354 = smul.addr %s353, 8
          %s355 = scalar_lea.vmem %s5, %s354
        $region60: #{_forward_impl.1} parent=55 // pred_fallthru
          _
      $region56: #{_forward_impl.1} parent=5 // pred_fallthru
        _
    $region6: #{_forward_impl.1} parent=1 // loop_footer
      %s17 = sadd.s32 1, %s13
    $region7: #{_forward_impl.1} parent=1 // loop_footer_branch
      %12 = sbr.rel target = $region3
    $region8: #{_forward_impl.1} parent=1 // loop_exit
      _
    %356 = vsyncpa [#allocation3], 1
    %s357 = scalar_lea.sflag [#allocation3], 1
    %358 = vsyncpa %s357, 1
    %359 = vsyncpa [#allocation5], 1

</llo_original>
